<compile_context>
chip_gen: v5e
topology: v5e:2x2
jax: 0.10.0
libtpu: 0.0.40
codegen_flags: <defaults>
</compile_context>

<pallas_src>
import functools

import jax
import jax.numpy as jnp
from jax import lax
from jax.experimental import pallas as pl
from jax.experimental.pallas import tpu as pltpu

_LANES = 128
_SUBLANES = 8
_MAX_TILE_ROWS = 2048   # (2048, 128) f32 block = 1 MiB per input per buffer


def _round_up(x, m):
    return ((x + m - 1) // m) * m


# ---------------------------------------------------------------------------
# Kernels
# ---------------------------------------------------------------------------
def _mse_none_kernel(p_ref, t_ref, o_ref, *, scale):
    d = p_ref[...].astype(jnp.float32) - t_ref[...].astype(jnp.float32)
    sq = d * d
    if scale != 1.0:
        sq = sq * scale
    o_ref[...] = sq.astype(o_ref.dtype)


def _mse_none_w_kernel(p_ref, t_ref, w_ref, o_ref, *, scale):
    d = p_ref[...].astype(jnp.float32) - t_ref[...].astype(jnp.float32)
    sq = d * d * w_ref[...].astype(jnp.float32)
    if scale != 1.0:
        sq = sq * scale
    o_ref[...] = sq.astype(o_ref.dtype)


def _sum_body(p_ref, t_ref, w_ref, o_ref, acc_ref, *, tile_rows, rows_valid,
              blocks_per_split, needs_mask):
    k = pl.program_id(1)

    @pl.when(k == 0)
    def _():
        acc_ref[...] = jnp.zeros_like(acc_ref)

    d = p_ref[...].astype(jnp.float32) - t_ref[...].astype(jnp.float32)
    sq = d * d
    if w_ref is not None:
        sq = sq * w_ref[...].astype(jnp.float32)
    if needs_mask:
        # Partial last block: zero out rows beyond the (padded) valid extent.
        block = pl.program_id(0) * blocks_per_split + k
        row_ids = block * tile_rows + lax.broadcasted_iota(jnp.int32, sq.shape, 0)
        sq = jnp.where(row_ids < rows_valid, sq, 0.0)

    # Lane-wide accumulation: only sublane/vreg adds per step; the single
    # cross-lane reduce to a scalar happens once, outside the kernel.
    acc_ref[...] += jnp.sum(sq, axis=0, keepdims=True)

    @pl.when(k == pl.num_programs(1) - 1)
    def _():
        o_ref[0] = acc_ref[...]


def _mse_sum_kernel(p_ref, t_ref, o_ref, acc_ref, **kw):
    _sum_body(p_ref, t_ref, None, o_ref, acc_ref, **kw)


def _mse_sum_w_kernel(p_ref, t_ref, w_ref, o_ref, acc_ref, **kw):
    _sum_body(p_ref, t_ref, w_ref, o_ref, acc_ref, **kw)


# ---------------------------------------------------------------------------
# Wrapper
# ---------------------------------------------------------------------------
def _lane_view(x, rows_p):
    """Flatten x to (rows_p, 128); pad only the small flat tail with zeros."""
    flat = x.reshape(-1)
    total = rows_p * _LANES
    if flat.shape[0] != total:
        flat = jnp.pad(flat, (0, total - flat.shape[0]))
    return flat.reshape(rows_p, _LANES)


def mse_loss(pred, target, weight=None, *, reduction='mean', avg_factor=None,
             loss_weight=1.0):
    """Pallas implementation of MSELoss.forward."""
    assert reduction in (None, 'none', 'mean', 'sum')
    reduction = 'none' if reduction is None else reduction
    assert pred.shape == target.shape
    if weight is not None and weight.shape != pred.shape:
        # TODO(synk): broadcast small/broadcastable weights inside the kernel
        # (extra BlockSpec / scalar) instead of materializing a full HBM copy.
        weight = jnp.broadcast_to(weight, pred.shape)

    ntot = 1
    for s in pred.shape:
        ntot *= int(s)

    # Lane-dense [rows_p, 128] layout; rows_p rounded to a multiple of 8 so
    # every block is (8k, 128) aligned.  Rows are NOT padded to a tile-rows
    # multiple: the last block may be partial.
    rows_p = _round_up(max(pl.cdiv(ntot, _LANES), 1), _SUBLANES)
    tile_rows = max(_SUBLANES,
                    min(_MAX_TILE_ROWS, _round_up(pl.cdiv(rows_p, 2), _SUBLANES)))
    total_blocks = pl.cdiv(rows_p, tile_rows)

    inputs = [_lane_view(pred, rows_p), _lane_view(target, rows_p)]
    if weight is not None:
        inputs.append(_lane_view(weight, rows_p))
    n_streams = len(inputs)
    itemsize = jnp.dtype(pred.dtype).itemsize

    if reduction == 'none':
        if weight is not None:
            kernel = functools.partial(_mse_none_w_kernel,
                                       scale=float(loss_weight))
        else:
            kernel = functools.partial(_mse_none_kernel,
                                       scale=float(loss_weight))
        cost = pl.CostEstimate(
            flops=3 * ntot, transcendentals=0,
            bytes_accessed=(n_streams + 1) * ntot * itemsize)
        res = pl.pallas_call(
            kernel,
            out_shape=jax.ShapeDtypeStruct((rows_p, _LANES), pred.dtype),
            grid=(total_blocks,),
            in_specs=[pl.BlockSpec((tile_rows, _LANES),
                                   lambda i: (i, 0))] * n_streams,
            out_specs=pl.BlockSpec((tile_rows, _LANES), lambda i: (i, 0)),
            compiler_params=pltpu.CompilerParams(
                dimension_semantics=("parallel",)),
            cost_estimate=cost,
        )(*inputs)
        if rows_p * _LANES == ntot:
            return res.reshape(pred.shape)
        return res.reshape(-1)[:ntot].reshape(pred.shape)

    # 'mean' / 'sum': fused reduction with a lane-wide f32 accumulator.
    if avg_factor is not None and reduction == 'sum':
        raise ValueError('avg_factor can not be used with reduction="sum"')

    # Leading "parallel" axis lets both v7x TensorCores stream HBM; each split
    # owns its own output row (single-core chips simply iterate the axis).
    num_splits = 2 if (total_blocks >= 2 and total_blocks % 2 == 0) else 1
    blocks_per_split = total_blocks // num_splits
    needs_mask = (rows_p % tile_rows) != 0

    kernel_fn = _mse_sum_w_kernel if weight is not None else _mse_sum_kernel
    kernel = functools.partial(
        kernel_fn, tile_rows=tile_rows, rows_valid=rows_p,
        blocks_per_split=blocks_per_split, needs_mask=needs_mask)

    bps = blocks_per_split
    cost = pl.CostEstimate(
        flops=4 * ntot, transcendentals=0,
        bytes_accessed=n_streams * ntot * itemsize + num_splits * _LANES * 4)
    partials = pl.pallas_call(
        kernel,
        out_shape=jax.ShapeDtypeStruct((num_splits, 1, _LANES), jnp.float32),
        grid=(num_splits, bps),
        in_specs=[pl.BlockSpec((tile_rows, _LANES),
                               lambda i, k: (i * bps + k, 0))] * n_streams,
        out_specs=pl.BlockSpec((1, 1, _LANES), lambda i, k: (i, 0, 0)),
        scratch_shapes=[pltpu.VMEM((1, _LANES), jnp.float32)],
        compiler_params=pltpu.CompilerParams(
            dimension_semantics=("parallel", "arbitrary")),
        cost_estimate=cost,
    )(*inputs)

    total = jnp.sum(partials)
    if reduction == 'mean':
        denom = float(avg_factor) if avg_factor is not None else float(ntot)
        total = total / denom
    return (total * float(loss_weight)).astype(pred.dtype)


# ---------------------------------------------------------------------------
# Reference (pure jnp) and self-test
# ---------------------------------------------------------------------------
def _reference(pred, target, weight=None, reduction='mean', avg_factor=None,
               loss_weight=1.0):
    loss = (pred.astype(jnp.float32) - target.astype(jnp.float32)) ** 2
    if weight is not None:
        loss = loss * jnp.broadcast_to(weight, pred.shape).astype(jnp.float32)
    if avg_factor is None:
        if reduction == 'mean':
            loss = jnp.mean(loss)
        elif reduction == 'sum':
            loss = jnp.sum(loss)
    else:
        if reduction == 'mean':
            loss = jnp.sum(loss) / avg_factor
    return (loss_weight * loss).astype(pred.dtype)


if __name__ == "__main__":
    key = jax.random.PRNGKey(0)
    k1, k2, k3, k4, k5 = jax.random.split(key, 5)

    shape = (2, 4, 16, 16)          # 2048 elems -> (16, 128), no padding
    pred = jax.random.normal(k1, shape, dtype=jnp.float32)
    target = jax.random.normal(k2, shape, dtype=jnp.float32)
    weight = jax.random.uniform(k3, shape, dtype=jnp.float32)

    # 1) default: reduction='mean', loss_weight=1.0
    l_mean = jax.block_until_ready(mse_loss(pred, target))
    assert jnp.allclose(l_mean, _reference(pred, target), atol=1e-5, rtol=1e-5)

    # 2) reduction='none' with weight and loss_weight=2.0
    l_none = jax.block_until_ready(
        mse_loss(pred, target, weight, reduction='none', loss_weight=2.0))
    assert l_none.shape == shape
    assert jnp.allclose(
        l_none,
        _reference(pred, target, weight, reduction='none', loss_weight=2.0),
        atol=1e-5, rtol=1e-5)

    # 3) reduction='sum'
    l_sum = jax.block_until_ready(mse_loss(pred, target, reduction='sum'))
    assert jnp.allclose(l_sum, _reference(pred, target, reduction='sum'),
                        atol=1e-4, rtol=1e-5)

    # 4) reduction='mean' with avg_factor and weight
    l_avg = jax.block_until_ready(
        mse_loss(pred, target, weight, reduction='mean', avg_factor=100.0,
                 loss_weight=0.5))
    assert jnp.allclose(
        l_avg,
        _reference(pred, target, weight, reduction='mean', avg_factor=100.0,
                   loss_weight=0.5),
        atol=1e-5, rtol=1e-5)

    # 5) ragged shape: exercises lane-tail pad, partial last block and
    #    in-kernel row masking on the reduction path.
    rshape = (5, 7, 64)             # 2240 elems -> rows_p=24, tile_rows=16
    rp = jax.random.normal(k4, rshape, dtype=jnp.float32)
    rt = jax.random.normal(k5, rshape, dtype=jnp.float32)
    l_r_mean = jax.block_until_ready(mse_loss(rp, rt))
    assert jnp.allclose(l_r_mean, _reference(rp, rt), atol=1e-5, rtol=1e-5)
    l_r_none = jax.block_until_ready(mse_loss(rp, rt, reduction='none'))
    assert l_r_none.shape == rshape
    assert jnp.allclose(l_r_none, _reference(rp, rt, reduction='none'),
                        atol=1e-5, rtol=1e-5)

    print("KERNEL_OK")
</pallas_src>

<mosaic_0001>
module attributes {stable_mosaic.version = 11 : i64} {
  func.func @_mse_sum_kernel(%arg0: i32, %arg1: i32, %arg2: memref<8x128xf32, #tpu.memory_space<vmem>>, %arg3: memref<8x128xf32, #tpu.memory_space<vmem>>, %arg4: memref<1x1x128xf32, #tpu.memory_space<vmem>>, %arg5: memref<1x128xf32, #tpu.memory_space<vmem>>) attributes {dimension_semantics = [#tpu.dimension_semantics<parallel>, #tpu.dimension_semantics<arbitrary>], iteration_bounds = array<i64: 2, 1>, scalar_prefetch = 0 : i64, scratch_operands = 1 : i64, tpu.core_type = #tpu.core_type<tc>, window_params = [{transform_indices = @transform_0, window_bounds = array<i64: 8, 128>}, {transform_indices = @transform_1, window_bounds = array<i64: 8, 128>}, {transform_indices = @transform_2, window_bounds = array<i64: 1, 1, 128>}]} {
    %c0_i32 = arith.constant 0 : i32
    %0 = arith.cmpi eq, %arg1, %c0_i32 : i32
    %1 = arith.extui %0 : i1 to i32
    %c0_i32_0 = arith.constant 0 : i32
    %2 = arith.cmpi ne, %1, %c0_i32_0 : i32
    scf.if %2 {
      %cst_10 = arith.constant 0.000000e+00 : f32
      %15 = vector.broadcast %cst_10 : f32 to vector<1x128xf32>
      %c0_11 = arith.constant 0 : index
      %c0_12 = arith.constant 0 : index
      %16 = vector.load %arg5[%c0_11, %c0_12] : memref<1x128xf32, #tpu.memory_space<vmem>>, vector<1x128xf32>
      tpu.vector_store %arg5[%c0_11, %c0_12], %15 {strides = array<i32>} : memref<1x128xf32, #tpu.memory_space<vmem>>, vector<1x128xf32>,
    } else {
    }
    %c0 = arith.constant 0 : index
    %c0_1 = arith.constant 0 : index
    %3 = vector.load %arg2[%c0, %c0_1] : memref<8x128xf32, #tpu.memory_space<vmem>>, vector<8x128xf32>
    %c0_2 = arith.constant 0 : index
    %c0_3 = arith.constant 0 : index
    %4 = vector.load %arg3[%c0_2, %c0_3] : memref<8x128xf32, #tpu.memory_space<vmem>>, vector<8x128xf32>
    %5 = arith.subf %3, %4 : vector<8x128xf32>
    %6 = arith.mulf %5, %5 : vector<8x128xf32>
    %c0_4 = arith.constant 0 : index
    %c0_5 = arith.constant 0 : index
    %7 = vector.load %arg5[%c0_4, %c0_5] : memref<1x128xf32, #tpu.memory_space<vmem>>, vector<1x128xf32>
    %cst = arith.constant dense<0.000000e+00> : vector<128xf32>
    %8 = vector.multi_reduction <add>, %6, %cst [0] : vector<8x128xf32> to vector<128xf32>
    %9 = vector.shape_cast %8 : vector<128xf32> to vector<1x128xf32>
    %10 = arith.addf %7, %9 : vector<1x128xf32>
    %c0_6 = arith.constant 0 : index
    %c0_7 = arith.constant 0 : index
    %11 = vector.load %arg5[%c0_6, %c0_7] : memref<1x128xf32, #tpu.memory_space<vmem>>, vector<1x128xf32>
    tpu.vector_store %arg5[%c0_6, %c0_7], %10 {strides = array<i32>} : memref<1x128xf32, #tpu.memory_space<vmem>>, vector<1x128xf32>,
    %c0_i32_8 = arith.constant 0 : i32
    %12 = arith.cmpi eq, %arg1, %c0_i32_8 : i32
    %13 = arith.extui %12 : i1 to i32
    %c0_i32_9 = arith.constant 0 : i32
    %14 = arith.cmpi ne, %13, %c0_i32_9 : i32
    scf.if %14 {
      %c0_10 = arith.constant 0 : index
      %c0_11 = arith.constant 0 : index
      %15 = vector.load %arg5[%c0_10, %c0_11] : memref<1x128xf32, #tpu.memory_space<vmem>>, vector<1x128xf32>
      %c0_12 = arith.constant 0 : index
      %c0_13 = arith.constant 0 : index
      %c0_14 = arith.constant 0 : index
      %16 = vector.load %arg4[%c0_12, %c0_13, %c0_14] : memref<1x1x128xf32, #tpu.memory_space<vmem>>, vector<1x1x128xf32>
      %17 = vector.shape_cast %16 : vector<1x1x128xf32> to vector<1x128xf32>
      %18 = vector.shape_cast %15 : vector<1x128xf32> to vector<1x1x128xf32>
      tpu.vector_store %arg4[%c0_12, %c0_13, %c0_14], %18 {strides = array<i32>} : memref<1x1x128xf32, #tpu.memory_space<vmem>>, vector<1x1x128xf32>,
    } else {
    }
    return
  }
  func.func @transform_0(%arg0: i32, %arg1: i32) -> (i32, i32) {
    %c1_i32 = arith.constant 1 : i32
    %0 = arith.muli %arg0, %c1_i32 : i32
    %1 = arith.addi %0, %arg1 : i32
    %c0_i32 = arith.constant 0 : i32
    %c0_i32_0 = arith.constant 0 : i32
    return %1, %c0_i32 : i32, i32
  }
  func.func @transform_1(%arg0: i32, %arg1: i32) -> (i32, i32) {
    %c1_i32 = arith.constant 1 : i32
    %0 = arith.muli %arg0, %c1_i32 : i32
    %1 = arith.addi %0, %arg1 : i32
    %c0_i32 = arith.constant 0 : i32
    %c0_i32_0 = arith.constant 0 : i32
    return %1, %c0_i32 : i32, i32
  }
  func.func @transform_2(%arg0: i32, %arg1: i32) -> (i32, i32, i32) {
    %c0_i32 = arith.constant 0 : i32
    %c0_i32_0 = arith.constant 0 : i32
    %c0_i32_1 = arith.constant 0 : i32
    return %arg0, %c0_i32, %c0_i32_0 : i32, i32, i32
  }
}

</mosaic_0001>

<llo_original>
// kernel: tpu_custom_call.1
$region0: #{tpu_custom_call.1}
  #allocation0 [shape = 'u32[]', space=smem, size = 0x4, offset = 0x4, fixed_abs, tag = 'smem constant byte address 0x4 - core index']
  #allocation1 [shape = 'u32[72,128]{1,0:T(1,128)}', space=vmem, size = 0x9000, scoped, tag = 'internal scratch']
  #allocation2 [shape = 'f32[1,128]{1,0:T(1,128)}', space=vmem, size = 0x200, scoped, tag = 'scratch operand']
  %s0 = inlined_call_operand.hbm [shape: f32[16,128], index: 0, kind: input, shape index: {}]
  %s1 = inlined_call_operand.hbm [shape: f32[16,128], index: 1, kind: input, shape index: {}]
  %s2 = inlined_call_operand.hbm [shape: f32[2,1,128], index: 2, kind: output, shape index: {}]
  %s3 = sld [smem:[#allocation0]]
  $region57: #{tpu_custom_call.1} parent=0
    _
  %s5 = ssub.s32 1, %s3
  %s6 = scalar_select 0, %s5, %s3
  $region1: #{tpu_custom_call.1} parent=0
    #allocation3 [shape = 'u8[8192]{0}', space=vmem, size = 0x2000, scoped, tag = 'input window, operand 0']
    #allocation4 [shape = 's32[2]{0}', space=sflag, size = 0x8, scoped, tag = 'scoped memory for tpu_custom_call.1']
    #allocation5 [shape = 's32[2]{0}', space=sflag, size = 0x8, scoped, tag = 'scoped memory for tpu_custom_call.1']
    #allocation6 [shape = 'u8[8192]{0}', space=vmem, size = 0x2000, scoped, tag = 'input window, operand 1']
    #allocation7 [shape = 's32[2]{0}', space=sflag, size = 0x8, scoped, tag = 'scoped memory for tpu_custom_call.1']
    #allocation8 [shape = 'u8[1024]{0}', space=vmem, size = 0x400, scoped, tag = 'output window, operand 0']
    %7 = vsyncpa [#allocation4], 0
    %s8 = scalar_lea.sflag [#allocation4], 1
    %9 = vsyncpa %s8, 0
    %10 = vsyncpa [#allocation7], 0
    %s11 = scalar_lea.sflag [#allocation7], 1
    %12 = vsyncpa %s11, 0
    %13 = vsyncpa [#allocation5], 0
    %s14 = scalar_lea.sflag [#allocation5], 1
    %15 = vsyncpa %s14, 0
    loop: start=0, step=1, limit=4
    $region2: #{tpu_custom_call.1} parent=1 // loop_pre_header
      _
    $region3: #{tpu_custom_call.1} parent=1 // loop_header
      %s17 = sphi 0, %s21
      %p18 = scmp.ge.s32.totalorder %s17, 4
      %s24 = sphi 0, %s36
      %s25 = sphi 0, %s32
      %s26 = sphi 0, %s24
      %s27 = sphi 0, %s25
      %s28 = sphi 0, %s26
      %s29 = sphi 0, %s27
      %s41 = sphi 0, %s43
      %s44 = sphi 0, %s41
      %s45 = sphi 0, %s44
      %s61 = sphi 0, %s45
      %s69 = sphi 0, %s71
      %s72 = sphi 0, %s69
      %s73 = sphi 0, %s72
      %s89 = sphi 0, %s73
      %s95 = sphi 0, %s97
      %s98 = sphi 0, %s95
      %s99 = sphi 0, %s98
      %s115 = sphi 0, %s99
    $region4: #{tpu_custom_call.1} parent=1 // loop_header_branch
      %20 = sbr.rel (%p18) target = $region8
    $region5: #{tpu_custom_call.1} parent=1 // loop_body
      %s22 = ssub.s32 %s17, 1
      %s23 = ssub.s32 %s17, 2
      %s30 = sadd.s32 1, %s25
      %p31 = scmp.ge.s32.totalorder %s30, 1
      %s32 = scalar_select %p31, 0, %s30
      %s33 = sadd.s32 1, %s24
      %s34 = scalar_select %p31, %s33, %s24
      %p35 = scmp.ge.s32.totalorder %s34, 2
      %s36 = scalar_select %p35, 0, %s34
      %s37 = sadd.s32 %s24, %s25
      %s38 = sadd.s32 %s36, %s32
      %s39 = ssub.s32 %s37, %s38
      %p40 = scmp.eq.s32.totalorder %s39, 0
      %s42 = sadd.s32 %s41, 1
      %s43 = scalar_select %p40, %s41, %s42
      %p46 = pneg %p40
      %p47 = scmp.eq.s32.totalorder %s17, 1
      %p48 = por %p46, %p47
      %p49 = scmp.ne.s32.totalorder %s41, %s44
      %p50 = scmp.eq.s32.totalorder %s17, 0
      %p51 = por %p49, %p50
      %p52 = scmp.ne.s32.totalorder %s41, %s44
      %p53 = scmp.eq.s32.totalorder %s22, 1
      %p54 = por %p52, %p53
      %p55 = scmp.ne.s32.totalorder %s44, %s45
      %p56 = scmp.eq.s32.totalorder %s22, 0
      %p57 = por %p55, %p56
      %p58 = scmp.ne.s32.totalorder %s44, %s45
      %p59 = scmp.eq.s32.totalorder %s23, 1
      %p60 = por %p58, %p59
      %p62 = scmp.ne.s32.totalorder %s45, %s61
      %p63 = scmp.eq.s32.totalorder %s23, 0
      %p64 = por %p62, %p63
      %s65 = sadd.s32 %s24, %s25
      %s66 = sadd.s32 %s36, %s32
      %s67 = ssub.s32 %s65, %s66
      %p68 = scmp.eq.s32.totalorder %s67, 0
      %s70 = sadd.s32 %s69, 1
      %s71 = scalar_select %p68, %s69, %s70
      %p74 = pneg %p68
      %p75 = scmp.eq.s32.totalorder %s17, 1
      %p76 = por %p74, %p75
      %p77 = scmp.ne.s32.totalorder %s69, %s72
      %p78 = scmp.eq.s32.totalorder %s17, 0
      %p79 = por %p77, %p78
      %p80 = scmp.ne.s32.totalorder %s69, %s72
      %p81 = scmp.eq.s32.totalorder %s22, 1
      %p82 = por %p80, %p81
      %p83 = scmp.ne.s32.totalorder %s72, %s73
      %p84 = scmp.eq.s32.totalorder %s22, 0
      %p85 = por %p83, %p84
      %p86 = scmp.ne.s32.totalorder %s72, %s73
      %p87 = scmp.eq.s32.totalorder %s23, 1
      %p88 = por %p86, %p87
      %p90 = scmp.ne.s32.totalorder %s73, %s89
      %p91 = scmp.eq.s32.totalorder %s23, 0
      %p92 = por %p90, %p91
      %s93 = ssub.s32 %s24, %s36
      %p94 = scmp.eq.s32.totalorder %s93, 0
      %s96 = sadd.s32 %s95, 1
      %s97 = scalar_select %p94, %s95, %s96
      %p100 = pneg %p94
      %p101 = scmp.eq.s32.totalorder %s17, 1
      %p102 = por %p100, %p101
      %p103 = scmp.ne.s32.totalorder %s95, %s98
      %p104 = scmp.eq.s32.totalorder %s17, 0
      %p105 = por %p103, %p104
      %p106 = scmp.ne.s32.totalorder %s95, %s98
      %p107 = scmp.eq.s32.totalorder %s22, 1
      %p108 = por %p106, %p107
      %p109 = scmp.ne.s32.totalorder %s98, %s99
      %p110 = scmp.eq.s32.totalorder %s22, 0
      %p111 = por %p109, %p110
      %p112 = scmp.ne.s32.totalorder %s98, %s99
      %p113 = scmp.eq.s32.totalorder %s23, 1
      %p114 = por %p112, %p113
      %p116 = scmp.ne.s32.totalorder %s99, %s115
      %p117 = scmp.eq.s32.totalorder %s23, 0
      %p118 = por %p116, %p117
      %p119 = scmp.le.s32.totalorder 1, %s17
      %p120 = scmp.lt.s32.totalorder %s17, 3
      %p121 = pnand %p119, %p120
      %p122 = pneg %p121
      // Predicated region
      $region9: #{tpu_custom_call.1} parent=5 // pred_check
        _
      $region10: #{tpu_custom_call.1} parent=5 // pred_check_branch
        %124 = sbr.rel (%p121) target = $region12
      $region11: #{tpu_custom_call.1} parent=5 // pred_region
        %s125 = ssub.s32 %s17, 1
      $region12: #{tpu_custom_call.1} parent=5 // pred_fallthru
        _
      %p126 = scmp.lt.s32.totalorder %s17, 2
      // Predicated region
      $region13: #{tpu_custom_call.1} parent=5 // pred_check
        %p127 = pneg %p126
      $region14: #{tpu_custom_call.1} parent=5 // pred_check_branch
        %129 = sbr.rel (%p127) target = $region16
      $region15: #{tpu_custom_call.1} parent=5 // pred_region
        // Predicated region
        $region17: #{tpu_custom_call.1} parent=15 // pred_check
          %p130 = pneg %p51
        $region18: #{tpu_custom_call.1} parent=15 // pred_check_branch
          %132 = sbr.rel (%p130) target = $region20
        $region19: #{tpu_custom_call.1} parent=15 // pred_region
          %s133 = sand.u32 %s41, 1
          %s134 = scalar_lea.sflag [#allocation4], %s133
          %s135 = sand.u32 %s41, 1
          %s136 = smul.addr %s135, 8
          %s137 = scalar_lea.vmem [#allocation3], %s136
          %s138 = sadd.s32 %s24, %s25
          %140 = vsyncadd %s134, 0
          %s141 = smul.addr %s138, 8
          %s142 = scalar_lea.hbm %s0, %s141
          %s144 = sshll.u32 %s142, 4
          %s145 = int_to_ptr.hbm [resolvable:$true] %s144
          %s146 = sshll.u32 %s137, 4
          %s147 = int_to_ptr.vmem [resolvable:$true] %s146
          %149 = dma.hbm_to_vmem [thread:$0]  %s145, 128, %s147, %s134
        $region20: #{tpu_custom_call.1} parent=15 // pred_fallthru
          _
        // Predicated region
        $region21: #{tpu_custom_call.1} parent=15 // pred_check
          %p150 = pneg %p79
        $region22: #{tpu_custom_call.1} parent=15 // pred_check_branch
          %152 = sbr.rel (%p150) target = $region24
        $region23: #{tpu_custom_call.1} parent=15 // pred_region
          %s153 = sand.u32 %s69, 1
          %s154 = scalar_lea.sflag [#allocation7], %s153
          %s155 = sand.u32 %s69, 1
          %s156 = smul.addr %s155, 8
          %s157 = scalar_lea.vmem [#allocation6], %s156
          %s158 = sadd.s32 %s24, %s25
          %160 = vsyncadd %s154, 0
          %s161 = smul.addr %s158, 8
          %s162 = scalar_lea.hbm %s1, %s161
          %s164 = sshll.u32 %s162, 4
          %s165 = int_to_ptr.hbm [resolvable:$true] %s164
          %s166 = sshll.u32 %s157, 4
          %s167 = int_to_ptr.vmem [resolvable:$true] %s166
          %169 = dma.hbm_to_vmem [thread:$0]  %s165, 128, %s167, %s154
        $region24: #{tpu_custom_call.1} parent=15 // pred_fallthru
          _
      $region16: #{tpu_custom_call.1} parent=5 // pred_fallthru
        _
      %p170 = scmp.le.s32.totalorder 1, %s17
      %p171 = scmp.lt.s32.totalorder %s17, 3
      %p172 = pnand %p170, %p171
      %p173 = pneg %p172
      // Predicated region
      $region25: #{tpu_custom_call.1} parent=5 // pred_check
        _
      $region26: #{tpu_custom_call.1} parent=5 // pred_check_branch
        %175 = sbr.rel (%p172) target = $region28
      $region27: #{tpu_custom_call.1} parent=5 // pred_region
        %s176 = ssub.s32 %s17, 1
        %s177 = sand.u32 %s44, 1
        %s178 = scalar_lea.sflag [#allocation4], %s177
        %s179 = sand.u32 %s44, 1
        %s180 = smul.addr %s179, 8
        %s181 = scalar_lea.vmem [#allocation3], %s180
        // Predicated region
        $region29: #{tpu_custom_call.1} parent=27 // pred_check
          %p182 = pneg %p57
        $region30: #{tpu_custom_call.1} parent=27 // pred_check_branch
          %184 = sbr.rel (%p182) target = $region32
        $region31: #{tpu_custom_call.1} parent=27 // pred_region
          %186 = dma.done %s178, 128
        $region32: #{tpu_custom_call.1} parent=27 // pred_fallthru
          _
        %s187 = sand.u32 %s72, 1
        %s188 = scalar_lea.sflag [#allocation7], %s187
        %s189 = sand.u32 %s72, 1
        %s190 = smul.addr %s189, 8
        %s191 = scalar_lea.vmem [#allocation6], %s190
        // Predicated region
        $region33: #{tpu_custom_call.1} parent=27 // pred_check
          %p192 = pneg %p85
        $region34: #{tpu_custom_call.1} parent=27 // pred_check_branch
          %194 = sbr.rel (%p192) target = $region36
        $region35: #{tpu_custom_call.1} parent=27 // pred_region
          %196 = dma.done %s188, 128
        $region36: #{tpu_custom_call.1} parent=27 // pred_fallthru
          _
        %s197 = sand.u32 %s44, 1
        %s198 = scalar_lea.sflag [#allocation4], %s197
        %s199 = sand.u32 %s44, 1
        %s200 = smul.addr %s199, 8
        %s201 = scalar_lea.vmem [#allocation3], %s200
        %p202 = pneg %p57
        %p203 = pneg %p54
        %s204 = sand.u32 %s72, 1
        %s205 = scalar_lea.sflag [#allocation7], %s204
        %s206 = sand.u32 %s72, 1
        %s207 = smul.addr %s206, 8
        %s208 = scalar_lea.vmem [#allocation6], %s207
        %p209 = pneg %p85
        %p210 = pneg %p82
        %p211 = pneg %p111
        %p212 = pneg %p108
        %s213 = sand.u32 %s98, 1
        %s214 = scalar_lea.sflag [#allocation5], %s213
        %s215 = sand.u32 %s98, 1
        %s216 = scalar_lea.vmem [#allocation8], %s215
        %s217 = sadd.s32 %s26, %s27
        %s218 = sadd.s32 %s26, %s27
        %p219 = scmp.eq.s32.totalorder %s27, 0
        // Predicated region
        $region37: #{tpu_custom_call.1} parent=27 // pred_check
          %p220 = pneg %p219
        $region38: #{tpu_custom_call.1} parent=27 // pred_check_branch
          %222 = sbr.rel (%p220) target = $region40
        $region39: #{tpu_custom_call.1} parent=27 // pred_region
          %223 = vst [vmem:[#allocation2] sm:$0x1] 0.0
        $region40: #{tpu_custom_call.1} parent=27 // pred_fallthru
          _
        %v224 = vld [vmem:[%s181] sm:$0xff]
        %v225 = vld [vmem:[%s191] sm:$0xff]
        %v226 = vsub.f32 %v224, %v225
        %v227 = vmul.f32 %v226, %v226
        %v228 = vld [vmem:[#allocation2] sm:$0x1]
        %v229 = vrot.slane %v227, 4
        %v230 = vadd.f32 %v227, %v229
        %v231 = vrot.slane %v230, 2
        %v232 = vadd.f32 %v230, %v231
        %v233 = vrot.slane %v232, 1
        %v234 = vadd.f32 %v232, %v233
        %v235 = vadd.f32 %v228, %v234
        %236 = vst [vmem:[#allocation2] sm:$0x1] %v235
        // Predicated region
        $region41: #{tpu_custom_call.1} parent=27 // pred_check
          %p237 = pneg %p219
        $region42: #{tpu_custom_call.1} parent=27 // pred_check_branch
          %239 = sbr.rel (%p237) target = $region44
        $region43: #{tpu_custom_call.1} parent=27 // pred_region
          %v240 = vld [vmem:[#allocation2] sm:$0x1]
          %241 = vst [vmem:[%s216] sm:$0x1] %v240
        $region44: #{tpu_custom_call.1} parent=27 // pred_fallthru
          _
        %s242 = sand.u32 %s98, 1
        %s243 = scalar_lea.sflag [#allocation5], %s242
        %s244 = sand.u32 %s98, 1
        %s245 = scalar_lea.vmem [#allocation8], %s244
        // Predicated region
        $region45: #{tpu_custom_call.1} parent=27 // pred_check
          %p246 = pneg %p108
        $region46: #{tpu_custom_call.1} parent=27 // pred_check_branch
          %248 = sbr.rel (%p246) target = $region48
        $region47: #{tpu_custom_call.1} parent=27 // pred_region
          %250 = vsyncadd %s243, 0
          %s251 = scalar_lea.hbm %s2, %s26
          %s253 = sshll.u32 %s245, 4
          %s254 = int_to_ptr.vmem [resolvable:$true] %s253
          %s255 = sshll.u32 %s251, 4
          %s256 = int_to_ptr.hbm [resolvable:$true] %s255
          %258 = dma.vmem_to_hbm [thread:$0]  %s254, 16, %s256, %s243
        $region48: #{tpu_custom_call.1} parent=27 // pred_fallthru
          _
      $region28: #{tpu_custom_call.1} parent=5 // pred_fallthru
        _
      %p259 = scmp.le.s32.totalorder 2, %s17
      // Predicated region
      $region49: #{tpu_custom_call.1} parent=5 // pred_check
        %p260 = pneg %p259
      $region50: #{tpu_custom_call.1} parent=5 // pred_check_branch
        %262 = sbr.rel (%p260) target = $region52
      $region51: #{tpu_custom_call.1} parent=5 // pred_region
        %s263 = ssub.s32 %s17, 2
        // Predicated region
        $region53: #{tpu_custom_call.1} parent=51 // pred_check
          %p264 = pneg %p114
        $region54: #{tpu_custom_call.1} parent=51 // pred_check_branch
          %266 = sbr.rel (%p264) target = $region56
        $region55: #{tpu_custom_call.1} parent=51 // pred_region
          %s267 = sand.u32 %s99, 1
          %s268 = scalar_lea.sflag [#allocation5], %s267
          %s269 = sand.u32 %s99, 1
          %s270 = scalar_lea.vmem [#allocation8], %s269
          %272 = dma.done %s268, 16
        $region56: #{tpu_custom_call.1} parent=51 // pred_fallthru
          _
      $region52: #{tpu_custom_call.1} parent=5 // pred_fallthru
        _
    $region6: #{tpu_custom_call.1} parent=1 // loop_footer
      %s21 = sadd.s32 1, %s17
    $region7: #{tpu_custom_call.1} parent=1 // loop_footer_branch
      %16 = sbr.rel target = $region3
    $region8: #{tpu_custom_call.1} parent=1 // loop_exit
      _
    %273 = vsyncpa [#allocation4], 1
    %s274 = scalar_lea.sflag [#allocation4], 1
    %275 = vsyncpa %s274, 1
    %276 = vsyncpa [#allocation7], 1
    %s277 = scalar_lea.sflag [#allocation7], 1
    %278 = vsyncpa %s277, 1
    %279 = vsyncpa [#allocation5], 1
    %s280 = scalar_lea.sflag [#allocation5], 1
    %281 = vsyncpa %s280, 1

</llo_original>
